<compile_context>
chip_gen: v5e
topology: v5e:2x2
jax: 0.10.0
libtpu: 0.0.40
codegen_flags: <defaults>
</compile_context>

<pallas_src>
import functools

import jax
import jax.numpy as jnp
from jax import lax
from jax.experimental import pallas as pl
from jax.experimental.pallas import tpu as pltpu


def _sa_kernel(x_ref, w_ref, o_ref, mpad_ref, *, H, W, K, pad):
    # x_ref   : (Bt, C, H, W)        VMEM  -- unpadded input tile
    # w_ref   : (K*K,)               SMEM  -- flattened conv weight (scalar reads)
    # o_ref   : (Bt, 1, H*W)         VMEM  -- sigmoid(conv(max_c(x))), lane-dense
    # mpad_ref: (Bt, H+2p, W+2p)     VMEM scratch -- zero-padded channel max
    Bt = x_ref.shape[0]
    C = x_ref.shape[1]
    Hp = H + 2 * pad
    Wp = W + 2 * pad

    # ---- fused zero padding: zero ONLY the pad border ---------------------
    # (the interior is fully overwritten by the channel max below, and border
    #  zeroing is exactly conv2d's zero padding of max_out)
    zrow = jnp.zeros((Bt, pad, Wp), jnp.float32)
    mpad_ref[:, :pad, :] = zrow
    mpad_ref[:, pad + H:, :] = zrow
    zcol = jnp.zeros((Bt, H, pad), jnp.float32)
    mpad_ref[:, pad:pad + H, :pad] = zcol
    mpad_ref[:, pad:pad + H, pad + W:] = zcol

    # ---- channel max: streamed running max (bounds live vregs to ~2 planes),
    #      done in the input dtype (bf16-native on v6e/v7x), cast once to f32.
    m = x_ref[:, 0]
    for c in range(1, C):
        m = jnp.maximum(m, x_ref[:, c])
    mpad_ref[:, pad:pad + H, pad:pad + W] = m.astype(jnp.float32)

    # ---- KxK conv as fully-unrolled scalar(SMEM) * vector(VPU) MACs --------
    # One partial accumulator per kernel row -> K independent dependence
    # chains (VALU has 4 issue slots); the row (sublane) window is hoisted out
    # of the column loop (K window loads instead of K*K).
    # TODO(synk): for W tiles >= 128, switch this loop to a banded-matrix MXU
    # matmul and tile W on the lane axis (not beneficial at the toy W=16).
    partials = []
    for i in range(K):
        row = mpad_ref[:, i:i + H, :]                       # (Bt, H, Wp) f32
        acc_i = w_ref[i * K + 0] * row[:, :, 0:W]
        for j in range(1, K):
            acc_i = acc_i + w_ref[i * K + j] * row[:, :, j:j + W]
        partials.append(acc_i)
    # Tree-sum the K partial accumulators.
    while len(partials) > 1:
        nxt = [partials[t] + partials[t + 1]
               for t in range(0, len(partials) - 1, 2)]
        if len(partials) % 2:
            nxt.append(partials[-1])
        partials = nxt
    acc = partials[0]                                       # (Bt, H, W) f32

    # ---- sigmoid + lane-dense store (H*W lanes, multiple of 128) -----------
    o_ref[...] = jax.nn.sigmoid(acc).reshape(Bt, 1, H * W).astype(o_ref.dtype)


def _vmem_capacity_bytes():
    """Per-TensorCore VMEM capacity; falls back to the smallest (v7x, 64 MiB)."""
    try:
        info = pltpu.get_tpu_info()
        for name in ("vmem_capacity_bytes", "vmem_bytes", "vmem_size_bytes"):
            v = getattr(info, name, None)
            if v:
                return int(v)
    except Exception:
        pass
    return 64 * 1024 * 1024


def _pick_batch_tile(B, C, H, W, Hp, Wp, x_itemsize, out_itemsize, budget_bytes):
    """Largest batch tile that fits the VMEM budget while keeping a multi-step grid."""
    def step_bytes(bt):
        return (2 * bt * C * H * W * x_itemsize       # double-buffered input block
                + 2 * bt * H * W * out_itemsize       # double-buffered output block
                + bt * Hp * Wp * 4)                   # f32 padded scratch (single)

    divisors = [d for d in range(1, B + 1) if B % d == 0]
    fitting = [d for d in divisors if step_bytes(d) <= budget_bytes] or [1]
    # Prefer >= 4 grid steps (2 per v7x TensorCore + pipelining), then >= 2,
    # otherwise take the largest tile that fits.
    for min_steps in (4, 2, 1):
        cands = [d for d in fitting if B // d >= min_steps]
        if cands:
            return max(cands)
    return 1


def spatial_attention(x, weight, *, batch_tile=None):
    """x: (B, C, H, W); weight: (K, K) conv1 weight (1,1,K,K squeezed) -> (B, 1, H, W)."""
    B, C, H, W = x.shape
    K = weight.shape[-1]
    pad = K // 2
    Hp, Wp = H + 2 * pad, W + 2 * pad

    # VMEM-budgeted batch tile + chip-aware VMEM limit (64 MiB/TC on v7x,
    # 128 MiB on v5e/v6e) instead of a hard-coded 32 MiB / whole-batch block.
    vmem_cap = _vmem_capacity_bytes()
    vmem_limit = max(32 * 1024 * 1024,
                     min(int(0.75 * vmem_cap), 100 * 1024 * 1024))
    if batch_tile is None:
        batch_tile = _pick_batch_tile(
            B, C, H, W, Hp, Wp,
            x_itemsize=x.dtype.itemsize, out_itemsize=x.dtype.itemsize,
            budget_bytes=int(0.6 * vmem_limit))
    Bt = batch_tile
    assert B % Bt == 0, "batch_tile must divide B"

    w_flat = weight.reshape(-1).astype(jnp.float32)          # (K*K,) scalar taps
    kernel = functools.partial(_sa_kernel, H=H, W=W, K=K, pad=pad)

    out = pl.pallas_call(
        kernel,
        out_shape=jax.ShapeDtypeStruct((B, 1, H * W), x.dtype),   # lane-dense output
        grid=(B // Bt,),
        in_specs=[
            pl.BlockSpec((Bt, C, H, W), lambda b: (b, 0, 0, 0)),
            # Whole weight array resident in SMEM; read tap-by-tap as scalars.
            pl.BlockSpec(memory_space=pltpu.MemorySpace.SMEM),
        ],
        out_specs=pl.BlockSpec((Bt, 1, H * W), lambda b: (b, 0, 0)),
        scratch_shapes=[pltpu.VMEM((Bt, Hp, Wp), jnp.float32)],
        compiler_params=pltpu.CompilerParams(
            dimension_semantics=("parallel",),      # shards steps across v7x's 2 TCs
            vmem_limit_bytes=vmem_limit,
        ),
    )(x, w_flat)
    return out.reshape(B, 1, H, W)


def _reference(x, weight):
    # Pure-JAX reference mirroring the PyTorch module.
    max_out = jnp.max(x, axis=1, keepdims=True)              # (B, 1, H, W)
    w4 = weight.reshape(1, 1, *weight.shape)                 # (O, I, Kh, Kw)
    pad = weight.shape[-1] // 2
    y = lax.conv_general_dilated(
        max_out, w4, window_strides=(1, 1),
        padding=((pad, pad), (pad, pad)),
        dimension_numbers=("NCHW", "OIHW", "NCHW"))
    return jax.nn.sigmoid(y)


if __name__ == "__main__":
    key = jax.random.PRNGKey(0)
    kx, kw = jax.random.split(key)

    B, C, H, W = 2, 4, 16, 16
    K = 7  # kernel_size=7 -> padding=3 (module default)

    x = jax.random.normal(kx, (B, C, H, W), dtype=jnp.float32)
    # Synthetic conv1 weight (PyTorch shape (1,1,7,7), squeezed to (7,7) here).
    weight = (jax.random.uniform(kw, (K, K), dtype=jnp.float32) - 0.5) * 0.5

    out = spatial_attention(x, weight)
    out = jax.block_until_ready(out)

    ref = _reference(x, weight)
    assert out.shape == (B, 1, H, W)
    assert jnp.allclose(out, ref, atol=1e-5, rtol=1e-5)

    print("KERNEL_OK")
</pallas_src>

<mosaic_0001>
module attributes {stable_mosaic.version = 11 : i64} {
  func.func @_sa_kernel(%arg0: i32, %arg1: memref<1x4x16x16xf32, #tpu.memory_space<vmem>>, %arg2: memref<49xf32, #tpu.memory_space<smem>>, %arg3: memref<1x1x256xf32, #tpu.memory_space<vmem>>, %arg4: memref<1x22x22xf32, #tpu.memory_space<vmem>>) attributes {dimension_semantics = [#tpu.dimension_semantics<parallel>], iteration_bounds = array<i64: 2>, scalar_prefetch = 0 : i64, scratch_operands = 1 : i64, tpu.core_type = #tpu.core_type<tc>, window_params = [{transform_indices = @transform_0, window_bounds = array<i64: 1, 4, 16, 16>}, {transform_indices = @transform_1, window_bounds = array<i64: 49>}, {transform_indices = @transform_2, window_bounds = array<i64: 1, 1, 256>}]} {
    %cst = arith.constant 0.000000e+00 : f32
    %0 = vector.broadcast %cst : f32 to vector<1x3x22xf32>
    %c0 = arith.constant 0 : index
    %c0_0 = arith.constant 0 : index
    %c0_1 = arith.constant 0 : index
    %1 = vector.load %arg4[%c0, %c0_0, %c0_1] : memref<1x22x22xf32, #tpu.memory_space<vmem>>, vector<1x3x22xf32>
    tpu.vector_store %arg4[%c0, %c0_0, %c0_1], %0 {strides = array<i32>} : memref<1x22x22xf32, #tpu.memory_space<vmem>>, vector<1x3x22xf32>,
    %c0_2 = arith.constant 0 : index
    %c19 = arith.constant 19 : index
    %c0_3 = arith.constant 0 : index
    %2 = vector.load %arg4[%c0_2, %c19, %c0_3] : memref<1x22x22xf32, #tpu.memory_space<vmem>>, vector<1x3x22xf32>
    tpu.vector_store %arg4[%c0_2, %c19, %c0_3], %0 {strides = array<i32>} : memref<1x22x22xf32, #tpu.memory_space<vmem>>, vector<1x3x22xf32>,
    %cst_4 = arith.constant 0.000000e+00 : f32
    %3 = vector.broadcast %cst_4 : f32 to vector<1x16x3xf32>
    %c0_5 = arith.constant 0 : index
    %c3 = arith.constant 3 : index
    %c0_6 = arith.constant 0 : index
    %4 = vector.load %arg4[%c0_5, %c3, %c0_6] : memref<1x22x22xf32, #tpu.memory_space<vmem>>, vector<1x16x3xf32>
    tpu.vector_store %arg4[%c0_5, %c3, %c0_6], %3 {strides = array<i32>} : memref<1x22x22xf32, #tpu.memory_space<vmem>>, vector<1x16x3xf32>,
    %c0_7 = arith.constant 0 : index
    %c3_8 = arith.constant 3 : index
    %c19_9 = arith.constant 19 : index
    %5 = vector.load %arg4[%c0_7, %c3_8, %c19_9] : memref<1x22x22xf32, #tpu.memory_space<vmem>>, vector<1x16x3xf32>
    tpu.vector_store %arg4[%c0_7, %c3_8, %c19_9], %3 {strides = array<i32>} : memref<1x22x22xf32, #tpu.memory_space<vmem>>, vector<1x16x3xf32>,
    %c0_10 = arith.constant 0 : index
    %c0_11 = arith.constant 0 : index
    %c0_12 = arith.constant 0 : index
    %c0_13 = arith.constant 0 : index
    %6 = vector.load %arg1[%c0_10, %c0_11, %c0_12, %c0_13] : memref<1x4x16x16xf32, #tpu.memory_space<vmem>>, vector<1x1x16x16xf32>
    %7 = vector.shape_cast %6 : vector<1x1x16x16xf32> to vector<1x16x16xf32>
    %c0_14 = arith.constant 0 : index
    %c1 = arith.constant 1 : index
    %c0_15 = arith.constant 0 : index
    %c0_16 = arith.constant 0 : index
    %8 = vector.load %arg1[%c0_14, %c1, %c0_15, %c0_16] : memref<1x4x16x16xf32, #tpu.memory_space<vmem>>, vector<1x1x16x16xf32>
    %9 = vector.shape_cast %8 : vector<1x1x16x16xf32> to vector<1x16x16xf32>
    %10 = arith.maximumf %7, %9 : vector<1x16x16xf32>
    %c0_17 = arith.constant 0 : index
    %c2 = arith.constant 2 : index
    %c0_18 = arith.constant 0 : index
    %c0_19 = arith.constant 0 : index
    %11 = vector.load %arg1[%c0_17, %c2, %c0_18, %c0_19] : memref<1x4x16x16xf32, #tpu.memory_space<vmem>>, vector<1x1x16x16xf32>
    %12 = vector.shape_cast %11 : vector<1x1x16x16xf32> to vector<1x16x16xf32>
    %13 = arith.maximumf %10, %12 : vector<1x16x16xf32>
    %c0_20 = arith.constant 0 : index
    %c3_21 = arith.constant 3 : index
    %c0_22 = arith.constant 0 : index
    %c0_23 = arith.constant 0 : index
    %14 = vector.load %arg1[%c0_20, %c3_21, %c0_22, %c0_23] : memref<1x4x16x16xf32, #tpu.memory_space<vmem>>, vector<1x1x16x16xf32>
    %15 = vector.shape_cast %14 : vector<1x1x16x16xf32> to vector<1x16x16xf32>
    %16 = arith.maximumf %13, %15 : vector<1x16x16xf32>
    %c0_24 = arith.constant 0 : index
    %c3_25 = arith.constant 3 : index
    %c3_26 = arith.constant 3 : index
    %17 = vector.load %arg4[%c0_24, %c3_25, %c3_26] : memref<1x22x22xf32, #tpu.memory_space<vmem>>, vector<1x16x16xf32>
    tpu.vector_store %arg4[%c0_24, %c3_25, %c3_26], %16 {strides = array<i32>} : memref<1x22x22xf32, #tpu.memory_space<vmem>>, vector<1x16x16xf32>,
    %c0_27 = arith.constant 0 : index
    %c0_28 = arith.constant 0 : index
    %c0_29 = arith.constant 0 : index
    %18 = vector.load %arg4[%c0_27, %c0_28, %c0_29] : memref<1x22x22xf32, #tpu.memory_space<vmem>>, vector<1x16x22xf32>
    %c0_30 = arith.constant 0 : index
    %19 = memref.load %arg2[%c0_30] : memref<49xf32, #tpu.memory_space<smem>>
    %20 = vector.extract_strided_slice %18 {offsets = [0, 0, 0], sizes = [1, 16, 16], strides = [1, 1, 1]} : vector<1x16x22xf32> to vector<1x16x16xf32>
    %21 = vector.broadcast %19 : f32 to vector<1x16x16xf32>
    %22 = arith.mulf %21, %20 : vector<1x16x16xf32>
    %c1_31 = arith.constant 1 : index
    %23 = memref.load %arg2[%c1_31] : memref<49xf32, #tpu.memory_space<smem>>
    %24 = vector.extract_strided_slice %18 {offsets = [0, 0, 1], sizes = [1, 16, 16], strides = [1, 1, 1]} : vector<1x16x22xf32> to vector<1x16x16xf32>
    %25 = vector.broadcast %23 : f32 to vector<1x16x16xf32>
    %26 = arith.mulf %25, %24 : vector<1x16x16xf32>
    %27 = arith.addf %22, %26 : vector<1x16x16xf32>
    %c2_32 = arith.constant 2 : index
    %28 = memref.load %arg2[%c2_32] : memref<49xf32, #tpu.memory_space<smem>>
    %29 = vector.extract_strided_slice %18 {offsets = [0, 0, 2], sizes = [1, 16, 16], strides = [1, 1, 1]} : vector<1x16x22xf32> to vector<1x16x16xf32>
    %30 = vector.broadcast %28 : f32 to vector<1x16x16xf32>
    %31 = arith.mulf %30, %29 : vector<1x16x16xf32>
    %32 = arith.addf %27, %31 : vector<1x16x16xf32>
    %c3_33 = arith.constant 3 : index
    %33 = memref.load %arg2[%c3_33] : memref<49xf32, #tpu.memory_space<smem>>
    %34 = vector.extract_strided_slice %18 {offsets = [0, 0, 3], sizes = [1, 16, 16], strides = [1, 1, 1]} : vector<1x16x22xf32> to vector<1x16x16xf32>
    %35 = vector.broadcast %33 : f32 to vector<1x16x16xf32>
    %36 = arith.mulf %35, %34 : vector<1x16x16xf32>
    %37 = arith.addf %32, %36 : vector<1x16x16xf32>
    %c4 = arith.constant 4 : index
    %38 = memref.load %arg2[%c4] : memref<49xf32, #tpu.memory_space<smem>>
    %39 = vector.extract_strided_slice %18 {offsets = [0, 0, 4], sizes = [1, 16, 16], strides = [1, 1, 1]} : vector<1x16x22xf32> to vector<1x16x16xf32>
    %40 = vector.broadcast %38 : f32 to vector<1x16x16xf32>
    %41 = arith.mulf %40, %39 : vector<1x16x16xf32>
    %42 = arith.addf %37, %41 : vector<1x16x16xf32>
    %c5 = arith.constant 5 : index
    %43 = memref.load %arg2[%c5] : memref<49xf32, #tpu.memory_space<smem>>
    %44 = vector.extract_strided_slice %18 {offsets = [0, 0, 5], sizes = [1, 16, 16], strides = [1, 1, 1]} : vector<1x16x22xf32> to vector<1x16x16xf32>
    %45 = vector.broadcast %43 : f32 to vector<1x16x16xf32>
    %46 = arith.mulf %45, %44 : vector<1x16x16xf32>
    %47 = arith.addf %42, %46 : vector<1x16x16xf32>
    %c6 = arith.constant 6 : index
    %48 = memref.load %arg2[%c6] : memref<49xf32, #tpu.memory_space<smem>>
    %49 = vector.extract_strided_slice %18 {offsets = [0, 0, 6], sizes = [1, 16, 16], strides = [1, 1, 1]} : vector<1x16x22xf32> to vector<1x16x16xf32>
    %50 = vector.broadcast %48 : f32 to vector<1x16x16xf32>
    %51 = arith.mulf %50, %49 : vector<1x16x16xf32>
    %52 = arith.addf %47, %51 : vector<1x16x16xf32>
    %c0_34 = arith.constant 0 : index
    %c1_35 = arith.constant 1 : index
    %c0_36 = arith.constant 0 : index
    %53 = vector.load %arg4[%c0_34, %c1_35, %c0_36] : memref<1x22x22xf32, #tpu.memory_space<vmem>>, vector<1x16x22xf32>
    %c7 = arith.constant 7 : index
    %54 = memref.load %arg2[%c7] : memref<49xf32, #tpu.memory_space<smem>>
    %55 = vector.extract_strided_slice %53 {offsets = [0, 0, 0], sizes = [1, 16, 16], strides = [1, 1, 1]} : vector<1x16x22xf32> to vector<1x16x16xf32>
    %56 = vector.broadcast %54 : f32 to vector<1x16x16xf32>
    %57 = arith.mulf %56, %55 : vector<1x16x16xf32>
    %c8 = arith.constant 8 : index
    %58 = memref.load %arg2[%c8] : memref<49xf32, #tpu.memory_space<smem>>
    %59 = vector.extract_strided_slice %53 {offsets = [0, 0, 1], sizes = [1, 16, 16], strides = [1, 1, 1]} : vector<1x16x22xf32> to vector<1x16x16xf32>
    %60 = vector.broadcast %58 : f32 to vector<1x16x16xf32>
    %61 = arith.mulf %60, %59 : vector<1x16x16xf32>
    %62 = arith.addf %57, %61 : vector<1x16x16xf32>
    %c9 = arith.constant 9 : index
    %63 = memref.load %arg2[%c9] : memref<49xf32, #tpu.memory_space<smem>>
    %64 = vector.extract_strided_slice %53 {offsets = [0, 0, 2], sizes = [1, 16, 16], strides = [1, 1, 1]} : vector<1x16x22xf32> to vector<1x16x16xf32>
    %65 = vector.broadcast %63 : f32 to vector<1x16x16xf32>
    %66 = arith.mulf %65, %64 : vector<1x16x16xf32>
    %67 = arith.addf %62, %66 : vector<1x16x16xf32>
    %c10 = arith.constant 10 : index
    %68 = memref.load %arg2[%c10] : memref<49xf32, #tpu.memory_space<smem>>
    %69 = vector.extract_strided_slice %53 {offsets = [0, 0, 3], sizes = [1, 16, 16], strides = [1, 1, 1]} : vector<1x16x22xf32> to vector<1x16x16xf32>
    %70 = vector.broadcast %68 : f32 to vector<1x16x16xf32>
    %71 = arith.mulf %70, %69 : vector<1x16x16xf32>
    %72 = arith.addf %67, %71 : vector<1x16x16xf32>
    %c11 = arith.constant 11 : index
    %73 = memref.load %arg2[%c11] : memref<49xf32, #tpu.memory_space<smem>>
    %74 = vector.extract_strided_slice %53 {offsets = [0, 0, 4], sizes = [1, 16, 16], strides = [1, 1, 1]} : vector<1x16x22xf32> to vector<1x16x16xf32>
    %75 = vector.broadcast %73 : f32 to vector<1x16x16xf32>
    %76 = arith.mulf %75, %74 : vector<1x16x16xf32>
    %77 = arith.addf %72, %76 : vector<1x16x16xf32>
    %c12 = arith.constant 12 : index
    %78 = memref.load %arg2[%c12] : memref<49xf32, #tpu.memory_space<smem>>
    %79 = vector.extract_strided_slice %53 {offsets = [0, 0, 5], sizes = [1, 16, 16], strides = [1, 1, 1]} : vector<1x16x22xf32> to vector<1x16x16xf32>
    %80 = vector.broadcast %78 : f32 to vector<1x16x16xf32>
    %81 = arith.mulf %80, %79 : vector<1x16x16xf32>
    %82 = arith.addf %77, %81 : vector<1x16x16xf32>
    %c13 = arith.constant 13 : index
    %83 = memref.load %arg2[%c13] : memref<49xf32, #tpu.memory_space<smem>>
    %84 = vector.extract_strided_slice %53 {offsets = [0, 0, 6], sizes = [1, 16, 16], strides = [1, 1, 1]} : vector<1x16x22xf32> to vector<1x16x16xf32>
    %85 = vector.broadcast %83 : f32 to vector<1x16x16xf32>
    %86 = arith.mulf %85, %84 : vector<1x16x16xf32>
    %87 = arith.addf %82, %86 : vector<1x16x16xf32>
    %c0_37 = arith.constant 0 : index
    %c2_38 = arith.constant 2 : index
    %c0_39 = arith.constant 0 : index
    %88 = vector.load %arg4[%c0_37, %c2_38, %c0_39] : memref<1x22x22xf32, #tpu.memory_space<vmem>>, vector<1x16x22xf32>
    %c14 = arith.constant 14 : index
    %89 = memref.load %arg2[%c14] : memref<49xf32, #tpu.memory_space<smem>>
    %90 = vector.extract_strided_slice %88 {offsets = [0, 0, 0], sizes = [1, 16, 16], strides = [1, 1, 1]} : vector<1x16x22xf32> to vector<1x16x16xf32>
    %91 = vector.broadcast %89 : f32 to vector<1x16x16xf32>
    %92 = arith.mulf %91, %90 : vector<1x16x16xf32>
    %c15 = arith.constant 15 : index
    %93 = memref.load %arg2[%c15] : memref<49xf32, #tpu.memory_space<smem>>
    %94 = vector.extract_strided_slice %88 {offsets = [0, 0, 1], sizes = [1, 16, 16], strides = [1, 1, 1]} : vector<1x16x22xf32> to vector<1x16x16xf32>
    %95 = vector.broadcast %93 : f32 to vector<1x16x16xf32>
    %96 = arith.mulf %95, %94 : vector<1x16x16xf32>
    %97 = arith.addf %92, %96 : vector<1x16x16xf32>
    %c16 = arith.constant 16 : index
    %98 = memref.load %arg2[%c16] : memref<49xf32, #tpu.memory_space<smem>>
    %99 = vector.extract_strided_slice %88 {offsets = [0, 0, 2], sizes = [1, 16, 16], strides = [1, 1, 1]} : vector<1x16x22xf32> to vector<1x16x16xf32>
    %100 = vector.broadcast %98 : f32 to vector<1x16x16xf32>
    %101 = arith.mulf %100, %99 : vector<1x16x16xf32>
    %102 = arith.addf %97, %101 : vector<1x16x16xf32>
    %c17 = arith.constant 17 : index
    %103 = memref.load %arg2[%c17] : memref<49xf32, #tpu.memory_space<smem>>
    %104 = vector.extract_strided_slice %88 {offsets = [0, 0, 3], sizes = [1, 16, 16], strides = [1, 1, 1]} : vector<1x16x22xf32> to vector<1x16x16xf32>
    %105 = vector.broadcast %103 : f32 to vector<1x16x16xf32>
    %106 = arith.mulf %105, %104 : vector<1x16x16xf32>
    %107 = arith.addf %102, %106 : vector<1x16x16xf32>
    %c18 = arith.constant 18 : index
    %108 = memref.load %arg2[%c18] : memref<49xf32, #tpu.memory_space<smem>>
    %109 = vector.extract_strided_slice %88 {offsets = [0, 0, 4], sizes = [1, 16, 16], strides = [1, 1, 1]} : vector<1x16x22xf32> to vector<1x16x16xf32>
    %110 = vector.broadcast %108 : f32 to vector<1x16x16xf32>
    %111 = arith.mulf %110, %109 : vector<1x16x16xf32>
    %112 = arith.addf %107, %111 : vector<1x16x16xf32>
    %c19_40 = arith.constant 19 : index
    %113 = memref.load %arg2[%c19_40] : memref<49xf32, #tpu.memory_space<smem>>
    %114 = vector.extract_strided_slice %88 {offsets = [0, 0, 5], sizes = [1, 16, 16], strides = [1, 1, 1]} : vector<1x16x22xf32> to vector<1x16x16xf32>
    %115 = vector.broadcast %113 : f32 to vector<1x16x16xf32>
    %116 = arith.mulf %115, %114 : vector<1x16x16xf32>
    %117 = arith.addf %112, %116 : vector<1x16x16xf32>
    %c20 = arith.constant 20 : index
    %118 = memref.load %arg2[%c20] : memref<49xf32, #tpu.memory_space<smem>>
    %119 = vector.extract_strided_slice %88 {offsets = [0, 0, 6], sizes = [1, 16, 16], strides = [1, 1, 1]} : vector<1x16x22xf32> to vector<1x16x16xf32>
    %120 = vector.broadcast %118 : f32 to vector<1x16x16xf32>
    %121 = arith.mulf %120, %119 : vector<1x16x16xf32>
    %122 = arith.addf %117, %121 : vector<1x16x16xf32>
    %c0_41 = arith.constant 0 : index
    %c3_42 = arith.constant 3 : index
    %c0_43 = arith.constant 0 : index
    %123 = vector.load %arg4[%c0_41, %c3_42, %c0_43] : memref<1x22x22xf32, #tpu.memory_space<vmem>>, vector<1x16x22xf32>
    %c21 = arith.constant 21 : index
    %124 = memref.load %arg2[%c21] : memref<49xf32, #tpu.memory_space<smem>>
    %125 = vector.extract_strided_slice %123 {offsets = [0, 0, 0], sizes = [1, 16, 16], strides = [1, 1, 1]} : vector<1x16x22xf32> to vector<1x16x16xf32>
    %126 = vector.broadcast %124 : f32 to vector<1x16x16xf32>
    %127 = arith.mulf %126, %125 : vector<1x16x16xf32>
    %c22 = arith.constant 22 : index
    %128 = memref.load %arg2[%c22] : memref<49xf32, #tpu.memory_space<smem>>
    %129 = vector.extract_strided_slice %123 {offsets = [0, 0, 1], sizes = [1, 16, 16], strides = [1, 1, 1]} : vector<1x16x22xf32> to vector<1x16x16xf32>
    %130 = vector.broadcast %128 : f32 to vector<1x16x16xf32>
    %131 = arith.mulf %130, %129 : vector<1x16x16xf32>
    %132 = arith.addf %127, %131 : vector<1x16x16xf32>
    %c23 = arith.constant 23 : index
    %133 = memref.load %arg2[%c23] : memref<49xf32, #tpu.memory_space<smem>>
    %134 = vector.extract_strided_slice %123 {offsets = [0, 0, 2], sizes = [1, 16, 16], strides = [1, 1, 1]} : vector<1x16x22xf32> to vector<1x16x16xf32>
    %135 = vector.broadcast %133 : f32 to vector<1x16x16xf32>
    %136 = arith.mulf %135, %134 : vector<1x16x16xf32>
    %137 = arith.addf %132, %136 : vector<1x16x16xf32>
    %c24 = arith.constant 24 : index
    %138 = memref.load %arg2[%c24] : memref<49xf32, #tpu.memory_space<smem>>
    %139 = vector.extract_strided_slice %123 {offsets = [0, 0, 3], sizes = [1, 16, 16], strides = [1, 1, 1]} : vector<1x16x22xf32> to vector<1x16x16xf32>
    %140 = vector.broadcast %138 : f32 to vector<1x16x16xf32>
    %141 = arith.mulf %140, %139 : vector<1x16x16xf32>
    %142 = arith.addf %137, %141 : vector<1x16x16xf32>
    %c25 = arith.constant 25 : index
    %143 = memref.load %arg2[%c25] : memref<49xf32, #tpu.memory_space<smem>>
    %144 = vector.extract_strided_slice %123 {offsets = [0, 0, 4], sizes = [1, 16, 16], strides = [1, 1, 1]} : vector<1x16x22xf32> to vector<1x16x16xf32>
    %145 = vector.broadcast %143 : f32 to vector<1x16x16xf32>
    %146 = arith.mulf %145, %144 : vector<1x16x16xf32>
    %147 = arith.addf %142, %146 : vector<1x16x16xf32>
    %c26 = arith.constant 26 : index
    %148 = memref.load %arg2[%c26] : memref<49xf32, #tpu.memory_space<smem>>
    %149 = vector.extract_strided_slice %123 {offsets = [0, 0, 5], sizes = [1, 16, 16], strides = [1, 1, 1]} : vector<1x16x22xf32> to vector<1x16x16xf32>
    %150 = vector.broadcast %148 : f32 to vector<1x16x16xf32>
    %151 = arith.mulf %150, %149 : vector<1x16x16xf32>
    %152 = arith.addf %147, %151 : vector<1x16x16xf32>
    %c27 = arith.constant 27 : index
    %153 = memref.load %arg2[%c27] : memref<49xf32, #tpu.memory_space<smem>>
    %154 = vector.extract_strided_slice %123 {offsets = [0, 0, 6], sizes = [1, 16, 16], strides = [1, 1, 1]} : vector<1x16x22xf32> to vector<1x16x16xf32>
    %155 = vector.broadcast %153 : f32 to vector<1x16x16xf32>
    %156 = arith.mulf %155, %154 : vector<1x16x16xf32>
    %157 = arith.addf %152, %156 : vector<1x16x16xf32>
    %c0_44 = arith.constant 0 : index
    %c4_45 = arith.constant 4 : index
    %c0_46 = arith.constant 0 : index
    %158 = vector.load %arg4[%c0_44, %c4_45, %c0_46] : memref<1x22x22xf32, #tpu.memory_space<vmem>>, vector<1x16x22xf32>
    %c28 = arith.constant 28 : index
    %159 = memref.load %arg2[%c28] : memref<49xf32, #tpu.memory_space<smem>>
    %160 = vector.extract_strided_slice %158 {offsets = [0, 0, 0], sizes = [1, 16, 16], strides = [1, 1, 1]} : vector<1x16x22xf32> to vector<1x16x16xf32>
    %161 = vector.broadcast %159 : f32 to vector<1x16x16xf32>
    %162 = arith.mulf %161, %160 : vector<1x16x16xf32>
    %c29 = arith.constant 29 : index
    %163 = memref.load %arg2[%c29] : memref<49xf32, #tpu.memory_space<smem>>
    %164 = vector.extract_strided_slice %158 {offsets = [0, 0, 1], sizes = [1, 16, 16], strides = [1, 1, 1]} : vector<1x16x22xf32> to vector<1x16x16xf32>
    %165 = vector.broadcast %163 : f32 to vector<1x16x16xf32>
    %166 = arith.mulf %165, %164 : vector<1x16x16xf32>
    %167 = arith.addf %162, %166 : vector<1x16x16xf32>
    %c30 = arith.constant 30 : index
    %168 = memref.load %arg2[%c30] : memref<49xf32, #tpu.memory_space<smem>>
    %169 = vector.extract_strided_slice %158 {offsets = [0, 0, 2], sizes = [1, 16, 16], strides = [1, 1, 1]} : vector<1x16x22xf32> to vector<1x16x16xf32>
    %170 = vector.broadcast %168 : f32 to vector<1x16x16xf32>
    %171 = arith.mulf %170, %169 : vector<1x16x16xf32>
    %172 = arith.addf %167, %171 : vector<1x16x16xf32>
    %c31 = arith.constant 31 : index
    %173 = memref.load %arg2[%c31] : memref<49xf32, #tpu.memory_space<smem>>
    %174 = vector.extract_strided_slice %158 {offsets = [0, 0, 3], sizes = [1, 16, 16], strides = [1, 1, 1]} : vector<1x16x22xf32> to vector<1x16x16xf32>
    %175 = vector.broadcast %173 : f32 to vector<1x16x16xf32>
    %176 = arith.mulf %175, %174 : vector<1x16x16xf32>
    %177 = arith.addf %172, %176 : vector<1x16x16xf32>
    %c32 = arith.constant 32 : index
    %178 = memref.load %arg2[%c32] : memref<49xf32, #tpu.memory_space<smem>>
    %179 = vector.extract_strided_slice %158 {offsets = [0, 0, 4], sizes = [1, 16, 16], strides = [1, 1, 1]} : vector<1x16x22xf32> to vector<1x16x16xf32>
    %180 = vector.broadcast %178 : f32 to vector<1x16x16xf32>
    %181 = arith.mulf %180, %179 : vector<1x16x16xf32>
    %182 = arith.addf %177, %181 : vector<1x16x16xf32>
    %c33 = arith.constant 33 : index
    %183 = memref.load %arg2[%c33] : memref<49xf32, #tpu.memory_space<smem>>
    %184 = vector.extract_strided_slice %158 {offsets = [0, 0, 5], sizes = [1, 16, 16], strides = [1, 1, 1]} : vector<1x16x22xf32> to vector<1x16x16xf32>
    %185 = vector.broadcast %183 : f32 to vector<1x16x16xf32>
    %186 = arith.mulf %185, %184 : vector<1x16x16xf32>
    %187 = arith.addf %182, %186 : vector<1x16x16xf32>
    %c34 = arith.constant 34 : index
    %188 = memref.load %arg2[%c34] : memref<49xf32, #tpu.memory_space<smem>>
    %189 = vector.extract_strided_slice %158 {offsets = [0, 0, 6], sizes = [1, 16, 16], strides = [1, 1, 1]} : vector<1x16x22xf32> to vector<1x16x16xf32>
    %190 = vector.broadcast %188 : f32 to vector<1x16x16xf32>
    %191 = arith.mulf %190, %189 : vector<1x16x16xf32>
    %192 = arith.addf %187, %191 : vector<1x16x16xf32>
    %c0_47 = arith.constant 0 : index
    %c5_48 = arith.constant 5 : index
    %c0_49 = arith.constant 0 : index
    %193 = vector.load %arg4[%c0_47, %c5_48, %c0_49] : memref<1x22x22xf32, #tpu.memory_space<vmem>>, vector<1x16x22xf32>
    %c35 = arith.constant 35 : index
    %194 = memref.load %arg2[%c35] : memref<49xf32, #tpu.memory_space<smem>>
    %195 = vector.extract_strided_slice %193 {offsets = [0, 0, 0], sizes = [1, 16, 16], strides = [1, 1, 1]} : vector<1x16x22xf32> to vector<1x16x16xf32>
    %196 = vector.broadcast %194 : f32 to vector<1x16x16xf32>
    %197 = arith.mulf %196, %195 : vector<1x16x16xf32>
    %c36 = arith.constant 36 : index
    %198 = memref.load %arg2[%c36] : memref<49xf32, #tpu.memory_space<smem>>
    %199 = vector.extract_strided_slice %193 {offsets = [0, 0, 1], sizes = [1, 16, 16], strides = [1, 1, 1]} : vector<1x16x22xf32> to vector<1x16x16xf32>
    %200 = vector.broadcast %198 : f32 to vector<1x16x16xf32>
    %201 = arith.mulf %200, %199 : vector<1x16x16xf32>
    %202 = arith.addf %197, %201 : vector<1x16x16xf32>
    %c37 = arith.constant 37 : index
    %203 = memref.load %arg2[%c37] : memref<49xf32, #tpu.memory_space<smem>>
    %204 = vector.extract_strided_slice %193 {offsets = [0, 0, 2], sizes = [1, 16, 16], strides = [1, 1, 1]} : vector<1x16x22xf32> to vector<1x16x16xf32>
    %205 = vector.broadcast %203 : f32 to vector<1x16x16xf32>
    %206 = arith.mulf %205, %204 : vector<1x16x16xf32>
    %207 = arith.addf %202, %206 : vector<1x16x16xf32>
    %c38 = arith.constant 38 : index
    %208 = memref.load %arg2[%c38] : memref<49xf32, #tpu.memory_space<smem>>
    %209 = vector.extract_strided_slice %193 {offsets = [0, 0, 3], sizes = [1, 16, 16], strides = [1, 1, 1]} : vector<1x16x22xf32> to vector<1x16x16xf32>
    %210 = vector.broadcast %208 : f32 to vector<1x16x16xf32>
    %211 = arith.mulf %210, %209 : vector<1x16x16xf32>
    %212 = arith.addf %207, %211 : vector<1x16x16xf32>
    %c39 = arith.constant 39 : index
    %213 = memref.load %arg2[%c39] : memref<49xf32, #tpu.memory_space<smem>>
    %214 = vector.extract_strided_slice %193 {offsets = [0, 0, 4], sizes = [1, 16, 16], strides = [1, 1, 1]} : vector<1x16x22xf32> to vector<1x16x16xf32>
    %215 = vector.broadcast %213 : f32 to vector<1x16x16xf32>
    %216 = arith.mulf %215, %214 : vector<1x16x16xf32>
    %217 = arith.addf %212, %216 : vector<1x16x16xf32>
    %c40 = arith.constant 40 : index
    %218 = memref.load %arg2[%c40] : memref<49xf32, #tpu.memory_space<smem>>
    %219 = vector.extract_strided_slice %193 {offsets = [0, 0, 5], sizes = [1, 16, 16], strides = [1, 1, 1]} : vector<1x16x22xf32> to vector<1x16x16xf32>
    %220 = vector.broadcast %218 : f32 to vector<1x16x16xf32>
    %221 = arith.mulf %220, %219 : vector<1x16x16xf32>
    %222 = arith.addf %217, %221 : vector<1x16x16xf32>
    %c41 = arith.constant 41 : index
    %223 = memref.load %arg2[%c41] : memref<49xf32, #tpu.memory_space<smem>>
    %224 = vector.extract_strided_slice %193 {offsets = [0, 0, 6], sizes = [1, 16, 16], strides = [1, 1, 1]} : vector<1x16x22xf32> to vector<1x16x16xf32>
    %225 = vector.broadcast %223 : f32 to vector<1x16x16xf32>
    %226 = arith.mulf %225, %224 : vector<1x16x16xf32>
    %227 = arith.addf %222, %226 : vector<1x16x16xf32>
    %c0_50 = arith.constant 0 : index
    %c6_51 = arith.constant 6 : index
    %c0_52 = arith.constant 0 : index
    %228 = vector.load %arg4[%c0_50, %c6_51, %c0_52] : memref<1x22x22xf32, #tpu.memory_space<vmem>>, vector<1x16x22xf32>
    %c42 = arith.constant 42 : index
    %229 = memref.load %arg2[%c42] : memref<49xf32, #tpu.memory_space<smem>>
    %230 = vector.extract_strided_slice %228 {offsets = [0, 0, 0], sizes = [1, 16, 16], strides = [1, 1, 1]} : vector<1x16x22xf32> to vector<1x16x16xf32>
    %231 = vector.broadcast %229 : f32 to vector<1x16x16xf32>
    %232 = arith.mulf %231, %230 : vector<1x16x16xf32>
    %c43 = arith.constant 43 : index
    %233 = memref.load %arg2[%c43] : memref<49xf32, #tpu.memory_space<smem>>
    %234 = vector.extract_strided_slice %228 {offsets = [0, 0, 1], sizes = [1, 16, 16], strides = [1, 1, 1]} : vector<1x16x22xf32> to vector<1x16x16xf32>
    %235 = vector.broadcast %233 : f32 to vector<1x16x16xf32>
    %236 = arith.mulf %235, %234 : vector<1x16x16xf32>
    %237 = arith.addf %232, %236 : vector<1x16x16xf32>
    %c44 = arith.constant 44 : index
    %238 = memref.load %arg2[%c44] : memref<49xf32, #tpu.memory_space<smem>>
    %239 = vector.extract_strided_slice %228 {offsets = [0, 0, 2], sizes = [1, 16, 16], strides = [1, 1, 1]} : vector<1x16x22xf32> to vector<1x16x16xf32>
    %240 = vector.broadcast %238 : f32 to vector<1x16x16xf32>
    %241 = arith.mulf %240, %239 : vector<1x16x16xf32>
    %242 = arith.addf %237, %241 : vector<1x16x16xf32>
    %c45 = arith.constant 45 : index
    %243 = memref.load %arg2[%c45] : memref<49xf32, #tpu.memory_space<smem>>
    %244 = vector.extract_strided_slice %228 {offsets = [0, 0, 3], sizes = [1, 16, 16], strides = [1, 1, 1]} : vector<1x16x22xf32> to vector<1x16x16xf32>
    %245 = vector.broadcast %243 : f32 to vector<1x16x16xf32>
    %246 = arith.mulf %245, %244 : vector<1x16x16xf32>
    %247 = arith.addf %242, %246 : vector<1x16x16xf32>
    %c46 = arith.constant 46 : index
    %248 = memref.load %arg2[%c46] : memref<49xf32, #tpu.memory_space<smem>>
    %249 = vector.extract_strided_slice %228 {offsets = [0, 0, 4], sizes = [1, 16, 16], strides = [1, 1, 1]} : vector<1x16x22xf32> to vector<1x16x16xf32>
    %250 = vector.broadcast %248 : f32 to vector<1x16x16xf32>
    %251 = arith.mulf %250, %249 : vector<1x16x16xf32>
    %252 = arith.addf %247, %251 : vector<1x16x16xf32>
    %c47 = arith.constant 47 : index
    %253 = memref.load %arg2[%c47] : memref<49xf32, #tpu.memory_space<smem>>
    %254 = vector.extract_strided_slice %228 {offsets = [0, 0, 5], sizes = [1, 16, 16], strides = [1, 1, 1]} : vector<1x16x22xf32> to vector<1x16x16xf32>
    %255 = vector.broadcast %253 : f32 to vector<1x16x16xf32>
    %256 = arith.mulf %255, %254 : vector<1x16x16xf32>
    %257 = arith.addf %252, %256 : vector<1x16x16xf32>
    %c48 = arith.constant 48 : index
    %258 = memref.load %arg2[%c48] : memref<49xf32, #tpu.memory_space<smem>>
    %259 = vector.extract_strided_slice %228 {offsets = [0, 0, 6], sizes = [1, 16, 16], strides = [1, 1, 1]} : vector<1x16x22xf32> to vector<1x16x16xf32>
    %260 = vector.broadcast %258 : f32 to vector<1x16x16xf32>
    %261 = arith.mulf %260, %259 : vector<1x16x16xf32>
    %262 = arith.addf %257, %261 : vector<1x16x16xf32>
    %263 = arith.addf %52, %87 : vector<1x16x16xf32>
    %264 = arith.addf %122, %157 : vector<1x16x16xf32>
    %265 = arith.addf %192, %227 : vector<1x16x16xf32>
    %266 = arith.addf %263, %264 : vector<1x16x16xf32>
    %267 = arith.addf %265, %262 : vector<1x16x16xf32>
    %268 = arith.addf %266, %267 : vector<1x16x16xf32>
    %269 = arith.negf %268 : vector<1x16x16xf32>
    %270 = math.exp %269 : vector<1x16x16xf32>
    %cst_53 = arith.constant 1.000000e+00 : f32
    %271 = vector.broadcast %cst_53 : f32 to vector<1x16x16xf32>
    %272 = arith.addf %271, %270 : vector<1x16x16xf32>
    %273 = arith.divf %271, %272 : vector<1x16x16xf32>
    %274 = vector.shape_cast %273 : vector<1x16x16xf32> to vector<1x1x256xf32>
    %c0_54 = arith.constant 0 : index
    %c0_55 = arith.constant 0 : index
    %c0_56 = arith.constant 0 : index
    %275 = vector.load %arg3[%c0_54, %c0_55, %c0_56] : memref<1x1x256xf32, #tpu.memory_space<vmem>>, vector<1x1x256xf32>
    tpu.vector_store %arg3[%c0_54, %c0_55, %c0_56], %274 {strides = array<i32>} : memref<1x1x256xf32, #tpu.memory_space<vmem>>, vector<1x1x256xf32>,
    return
  }
  func.func @transform_0(%arg0: i32) -> (i32, i32, i32, i32) {
    %c0_i32 = arith.constant 0 : i32
    %c0_i32_0 = arith.constant 0 : i32
    %c0_i32_1 = arith.constant 0 : i32
    %c0_i32_2 = arith.constant 0 : i32
    return %arg0, %c0_i32, %c0_i32_0, %c0_i32_1 : i32, i32, i32, i32
  }
  func.func @transform_1(%arg0: i32) -> i32 {
    %c0_i32 = arith.constant 0 : i32
    %c0_i32_0 = arith.constant 0 : i32
    return %c0_i32 : i32
  }
  func.func @transform_2(%arg0: i32) -> (i32, i32, i32) {
    %c0_i32 = arith.constant 0 : i32
    %c0_i32_0 = arith.constant 0 : i32
    %c0_i32_1 = arith.constant 0 : i32
    return %arg0, %c0_i32, %c0_i32_0 : i32, i32, i32
  }
}

</mosaic_0001>

<llo_original>
// kernel: tpu_custom_call.1
$region0: #{tpu_custom_call.1}
  #allocation0 [shape = 'u32[]', space=smem, size = 0x4, offset = 0x4, fixed_abs, tag = 'smem constant byte address 0x4 - core index']
  #allocation1 [shape = 'u32[72,128]{1,0:T(1,128)}', space=vmem, size = 0x9000, scoped, tag = 'internal scratch']
  #allocation2 [shape = 'f32[1,22,22]{2,1,0:T(8,128)}', space=vmem, size = 0x3000, scoped, tag = 'scratch operand']
  %s0 = inlined_call_operand.hbm [shape: f32[2,4,16,16], index: 0, kind: input, shape index: {}]
  %s1 = inlined_call_operand.hbm [shape: f32[49], index: 1, kind: input, shape index: {}]
  %s2 = inlined_call_operand.hbm [shape: f32[2,1,256], index: 2, kind: output, shape index: {}]
  %s3 = sld [smem:[#allocation0]]
  $region49: #{tpu_custom_call.1} parent=0
    _
  %s5 = ssub.s32 1, %s3
  %s6 = scalar_select 0, %s5, %s3
  $region1: #{tpu_custom_call.1} parent=0
    #allocation3 [shape = 'u8[65536]{0}', space=vmem, size = 0x10000, scoped, tag = 'input window, operand 0']
    #allocation4 [shape = 's32[2]{0}', space=sflag, size = 0x8, scoped, tag = 'scoped memory for tpu_custom_call.1']
    #allocation5 [shape = 's32[2]{0}', space=sflag, size = 0x8, scoped, tag = 'scoped memory for tpu_custom_call.1']
    #allocation6 [shape = 's32[2]{0}', space=sflag, size = 0x8, scoped, tag = 'scoped memory for tpu_custom_call.1']
    #allocation7 [shape = 'u8[512]{0}', space=smem, size = 0x200, scoped, tag = 'input window, operand 1, single buffered']
    #allocation8 [shape = 'u8[2048]{0}', space=vmem, size = 0x800, scoped, tag = 'output window, operand 0']
    %7 = vsyncpa [#allocation4], 0
    %s8 = scalar_lea.sflag [#allocation4], 1
    %9 = vsyncpa %s8, 0
    %10 = vsyncpa [#allocation6], 0
    %11 = vsyncpa [#allocation5], 0
    %s12 = scalar_lea.sflag [#allocation5], 1
    %13 = vsyncpa %s12, 0
    loop: start=0, step=1, limit=4
    $region2: #{tpu_custom_call.1} parent=1 // loop_pre_header
      _
    $region3: #{tpu_custom_call.1} parent=1 // loop_header
      %s15 = sphi 0, %s19
      %p16 = scmp.ge.s32.totalorder %s15, 4
      %s25 = sphi 0, %s27
      %s28 = sphi 0, %s25
      %s29 = sphi 0, %s28
      %s45 = sphi 0, %s29
      %s49 = sphi 0, %s49
      %s51 = sphi 0, %s49
      %s52 = sphi 0, %s51
      %s66 = sphi 0, %s52
      %s72 = sphi 0, %s74
      %s75 = sphi 0, %s72
      %s76 = sphi 0, %s75
      %s92 = sphi 0, %s76
    $region4: #{tpu_custom_call.1} parent=1 // loop_header_branch
      %18 = sbr.rel (%p16) target = $region8
    $region5: #{tpu_custom_call.1} parent=1 // loop_body
      %s20 = ssub.s32 %s15, 1
      %s21 = ssub.s32 %s15, 2
      %s22 = sadd.s32 %s15, 1
      %s23 = ssub.s32 %s15, %s22
      %p24 = scmp.eq.s32.totalorder %s23, 0
      %s26 = sadd.s32 %s25, 1
      %s27 = scalar_select %p24, %s25, %s26
      %p30 = pneg %p24
      %p31 = scmp.eq.s32.totalorder %s15, 1
      %p32 = por %p30, %p31
      %p33 = scmp.ne.s32.totalorder %s25, %s28
      %p34 = scmp.eq.s32.totalorder %s15, 0
      %p35 = por %p33, %p34
      %p36 = scmp.ne.s32.totalorder %s25, %s28
      %p37 = scmp.eq.s32.totalorder %s20, 1
      %p38 = por %p36, %p37
      %p39 = scmp.ne.s32.totalorder %s28, %s29
      %p40 = scmp.eq.s32.totalorder %s20, 0
      %p41 = por %p39, %p40
      %p42 = scmp.ne.s32.totalorder %s28, %s29
      %p43 = scmp.eq.s32.totalorder %s21, 1
      %p44 = por %p42, %p43
      %p46 = scmp.ne.s32.totalorder %s29, %s45
      %p47 = scmp.eq.s32.totalorder %s21, 0
      %p48 = por %p46, %p47
      %s50 = sadd.s32 %s49, 1
      %p53 = scmp.eq.s32.totalorder %s15, 1
      %p54 = scmp.ne.s32.totalorder %s49, %s51
      %p55 = scmp.eq.s32.totalorder %s15, 0
      %p56 = por %p54, %p55
      %p57 = scmp.ne.s32.totalorder %s49, %s51
      %p58 = scmp.eq.s32.totalorder %s20, 1
      %p59 = por %p57, %p58
      %p60 = scmp.ne.s32.totalorder %s51, %s52
      %p61 = scmp.eq.s32.totalorder %s20, 0
      %p62 = por %p60, %p61
      %p63 = scmp.ne.s32.totalorder %s51, %s52
      %p64 = scmp.eq.s32.totalorder %s21, 1
      %p65 = por %p63, %p64
      %p67 = scmp.ne.s32.totalorder %s52, %s66
      %p68 = scmp.eq.s32.totalorder %s21, 0
      %p69 = por %p67, %p68
      %s70 = ssub.s32 %s15, %s22
      %p71 = scmp.eq.s32.totalorder %s70, 0
      %s73 = sadd.s32 %s72, 1
      %s74 = scalar_select %p71, %s72, %s73
      %p77 = pneg %p71
      %p78 = scmp.eq.s32.totalorder %s15, 1
      %p79 = por %p77, %p78
      %p80 = scmp.ne.s32.totalorder %s72, %s75
      %p81 = scmp.eq.s32.totalorder %s15, 0
      %p82 = por %p80, %p81
      %p83 = scmp.ne.s32.totalorder %s72, %s75
      %p84 = scmp.eq.s32.totalorder %s20, 1
      %p85 = por %p83, %p84
      %p86 = scmp.ne.s32.totalorder %s75, %s76
      %p87 = scmp.eq.s32.totalorder %s20, 0
      %p88 = por %p86, %p87
      %p89 = scmp.ne.s32.totalorder %s75, %s76
      %p90 = scmp.eq.s32.totalorder %s21, 1
      %p91 = por %p89, %p90
      %p93 = scmp.ne.s32.totalorder %s76, %s92
      %p94 = scmp.eq.s32.totalorder %s21, 0
      %p95 = por %p93, %p94
      %p96 = scmp.le.s32.totalorder 1, %s15
      %p97 = scmp.lt.s32.totalorder %s15, 3
      %p98 = pnand %p96, %p97
      %p99 = pneg %p98
      // Predicated region
      $region9: #{tpu_custom_call.1} parent=5 // pred_check
        _
      $region10: #{tpu_custom_call.1} parent=5 // pred_check_branch
        %101 = sbr.rel (%p98) target = $region12
      $region11: #{tpu_custom_call.1} parent=5 // pred_region
        %s102 = ssub.s32 %s15, 1
        // Predicated region
        $region13: #{tpu_custom_call.1} parent=11 // pred_check
          %p103 = pneg %p62
        $region14: #{tpu_custom_call.1} parent=11 // pred_check_branch
          %105 = sbr.rel (%p103) target = $region16
        $region15: #{tpu_custom_call.1} parent=11 // pred_region
          %107 = vsyncadd [#allocation6], 0
          %s109 = sshll.u32 %s1, 4
          %s110 = int_to_ptr.hbm [resolvable:$true] %s109
          %112 = dma.hbm_to_smem %s110, 16, [#allocation7], [#allocation6]
        $region16: #{tpu_custom_call.1} parent=11 // pred_fallthru
          _
      $region12: #{tpu_custom_call.1} parent=5 // pred_fallthru
        _
      %p113 = scmp.lt.s32.totalorder %s15, 2
      // Predicated region
      $region17: #{tpu_custom_call.1} parent=5 // pred_check
        %p114 = pneg %p113
      $region18: #{tpu_custom_call.1} parent=5 // pred_check_branch
        %116 = sbr.rel (%p114) target = $region20
      $region19: #{tpu_custom_call.1} parent=5 // pred_region
        // Predicated region
        $region21: #{tpu_custom_call.1} parent=19 // pred_check
          %p117 = pneg %p35
        $region22: #{tpu_custom_call.1} parent=19 // pred_check_branch
          %119 = sbr.rel (%p117) target = $region24
        $region23: #{tpu_custom_call.1} parent=19 // pred_region
          %s120 = sand.u32 %s25, 1
          %s121 = scalar_lea.sflag [#allocation4], %s120
          %s122 = sand.u32 %s25, 1
          %s123 = smul.addr %s122, 64
          %s124 = scalar_lea.vmem [#allocation3], %s123
          %126 = vsyncadd %s121, 0
          %s127 = smul.addr %s15, 8
          %s128 = smul.addr %s127, 8
          %s129 = scalar_lea.hbm %s0, %s128
          %s130 = sshll.u32 %s129, 4
          %s131 = int_to_ptr.hbm [resolvable:$true] %s130
          %s132 = sshll.u32 %s124, 4
          %s133 = int_to_ptr.vmem [resolvable:$true] %s132
          %138 = dma.hbm_to_vmem [thread:$0]  %s131, 1024, %s133, %s121, 128, 128, 8
        $region24: #{tpu_custom_call.1} parent=19 // pred_fallthru
          _
      $region20: #{tpu_custom_call.1} parent=5 // pred_fallthru
        _
      %p139 = scmp.le.s32.totalorder 1, %s15
      %p140 = scmp.lt.s32.totalorder %s15, 3
      %p141 = pnand %p139, %p140
      %p142 = pneg %p141
      // Predicated region
      $region25: #{tpu_custom_call.1} parent=5 // pred_check
        _
      $region26: #{tpu_custom_call.1} parent=5 // pred_check_branch
        %144 = sbr.rel (%p141) target = $region28
      $region27: #{tpu_custom_call.1} parent=5 // pred_region
        %s145 = ssub.s32 %s15, 1
        %s146 = sand.u32 %s28, 1
        %s147 = scalar_lea.sflag [#allocation4], %s146
        %s148 = sand.u32 %s28, 1
        %s149 = smul.addr %s148, 64
        %s150 = scalar_lea.vmem [#allocation3], %s149
        // Predicated region
        $region29: #{tpu_custom_call.1} parent=27 // pred_check
          %p151 = pneg %p41
        $region30: #{tpu_custom_call.1} parent=27 // pred_check_branch
          %153 = sbr.rel (%p151) target = $region32
        $region31: #{tpu_custom_call.1} parent=27 // pred_region
          %155 = dma.done %s147, 1024
        $region32: #{tpu_custom_call.1} parent=27 // pred_fallthru
          _
        // Predicated region
        $region33: #{tpu_custom_call.1} parent=27 // pred_check
          %p156 = pneg %p62
        $region34: #{tpu_custom_call.1} parent=27 // pred_check_branch
          %158 = sbr.rel (%p156) target = $region36
        $region35: #{tpu_custom_call.1} parent=27 // pred_region
          %160 = dma.done [#allocation6], 16
        $region36: #{tpu_custom_call.1} parent=27 // pred_fallthru
          _
        %161 = sfence
        %s162 = sand.u32 %s28, 1
        %s163 = scalar_lea.sflag [#allocation4], %s162
        %s164 = sand.u32 %s28, 1
        %s165 = smul.addr %s164, 64
        %s166 = scalar_lea.vmem [#allocation3], %s165
        %p167 = pneg %p41
        %p168 = pneg %p38
        %p169 = pneg %p62
        %p170 = pneg %p59
        %p171 = pneg %p88
        %p172 = pneg %p85
        %s173 = sand.u32 %s75, 1
        %s174 = scalar_lea.sflag [#allocation5], %s173
        %s175 = sand.u32 %s75, 1
        %s176 = smul.addr %s175, 2
        %s177 = scalar_lea.vmem [#allocation8], %s176
        %vm178 = vcmask 174080
        %179 = vst.msk [vmem:[#allocation2] sm:$0x7] %vm178, 0.0
        %180 = vst.msk [vmem:[#allocation2 + $0x13] sm:$0x7] %vm178, 0.0
        %vm181 = vcmask 23552
        %182 = vst.msk [vmem:[#allocation2 + $0x3] sm:$0xff] %vm181, 0.0
        %183 = vst.msk [vmem:[#allocation2 + $0xb] sm:$0xff] %vm181, 0.0
        %vm184 = vcmask 179352
        %185 = vst.msk [vmem:[#allocation2 + $0x3] sm:$0xff] %vm184, 0.0
        %186 = vst.msk [vmem:[#allocation2 + $0xb] sm:$0xff] %vm184, 0.0
        %v187 = vld [vmem:[%s150] sm:$0xff]
        %v188 = vld [vmem:[%s150 + $0x8] sm:$0xff]
        %s189 = scalar_lea.vmem %s150, 16 [#allocation3]
        %v190 = vld [vmem:[%s189] sm:$0xff]
        %v191 = vld [vmem:[%s189 + $0x8] sm:$0xff]
        %v192 = vmax.f32 %v187, %v190
        %v193 = vmax.f32 %v188, %v191
        %s194 = scalar_lea.vmem %s150, 32 [#allocation3]
        %v195 = vld [vmem:[%s194] sm:$0xff]
        %v196 = vld [vmem:[%s194 + $0x8] sm:$0xff]
        %v197 = vmax.f32 %v192, %v195
        %v198 = vmax.f32 %v193, %v196
        %s199 = scalar_lea.vmem %s150, 48 [#allocation3]
        %v200 = vld [vmem:[%s199] sm:$0xff]
        %v201 = vld [vmem:[%s199 + $0x8] sm:$0xff]
        %v202 = vmax.f32 %v197, %v200
        %v203 = vmax.f32 %v198, %v201
        %206 = vrot.lane.b32.xlu0 %v202, 3
        %v207 = vpop.permute.xlu0 %206
        %208 = vrot.lane.b32.xlu0 %v203, 3
        %v209 = vpop.permute.xlu0 %208
        %vm212 = vcmask 154648
        %213 = vst.msk [vmem:[#allocation2 + $0x3] sm:$0xff] %vm212, %v207
        %214 = vst.msk [vmem:[#allocation2 + $0xb] sm:$0xff] %vm212, %v209
        %v215 = vld [vmem:[#allocation2] sm:$0xff]
        %v216 = vld [vmem:[#allocation2 + $0x8] sm:$0xff]
        %s217 = sld [smem:[#allocation7]]
        %v218 = vstv %s217
        %v219 = vmul.f32 %v218, %v215
        %v220 = vmul.f32 %v218, %v216
        %s221 = sld [smem:[#allocation7 + $0x1]]
        %v222 = vstv %s221
        %v223 = vmul.f32 %v222, %v215
        %v224 = vmul.f32 %v222, %v216
        %227 = vrot.lane.b32.xlu0 %v223, 127
        %v228 = vpop.permute.xlu0 %227
        %229 = vrot.lane.b32.xlu0 %v224, 127
        %v230 = vpop.permute.xlu0 %229
        %v233 = vadd.f32 %v219, %v228
        %v234 = vadd.f32 %v220, %v230
        %s235 = sld [smem:[#allocation7 + $0x2]]
        %v236 = vstv %s235
        %v237 = vmul.f32 %v236, %v215
        %v238 = vmul.f32 %v236, %v216
        %241 = vrot.lane.b32.xlu0 %v237, 126
        %v242 = vpop.permute.xlu0 %241
        %243 = vrot.lane.b32.xlu0 %v238, 126
        %v244 = vpop.permute.xlu0 %243
        %v247 = vadd.f32 %v233, %v242
        %v248 = vadd.f32 %v234, %v244
        %s249 = sld [smem:[#allocation7 + $0x3]]
        %v250 = vstv %s249
        %v251 = vmul.f32 %v250, %v215
        %v252 = vmul.f32 %v250, %v216
        %255 = vrot.lane.b32.xlu0 %v251, 125
        %v256 = vpop.permute.xlu0 %255
        %257 = vrot.lane.b32.xlu0 %v252, 125
        %v258 = vpop.permute.xlu0 %257
        %v261 = vadd.f32 %v247, %v256
        %v262 = vadd.f32 %v248, %v258
        %s263 = sld [smem:[#allocation7 + $0x4]]
        %v264 = vstv %s263
        %v265 = vmul.f32 %v264, %v215
        %v266 = vmul.f32 %v264, %v216
        %269 = vrot.lane.b32.xlu0 %v265, 124
        %v270 = vpop.permute.xlu0 %269
        %271 = vrot.lane.b32.xlu0 %v266, 124
        %v272 = vpop.permute.xlu0 %271
        %v275 = vadd.f32 %v261, %v270
        %v276 = vadd.f32 %v262, %v272
        %s277 = sld [smem:[#allocation7 + $0x5]]
        %v278 = vstv %s277
        %v279 = vmul.f32 %v278, %v215
        %v280 = vmul.f32 %v278, %v216
        %283 = vrot.lane.b32.xlu0 %v279, 123
        %v284 = vpop.permute.xlu0 %283
        %285 = vrot.lane.b32.xlu0 %v280, 123
        %v286 = vpop.permute.xlu0 %285
        %v289 = vadd.f32 %v275, %v284
        %v290 = vadd.f32 %v276, %v286
        %s291 = sld [smem:[#allocation7 + $0x6]]
        %v292 = vstv %s291
        %v293 = vmul.f32 %v292, %v215
        %v294 = vmul.f32 %v292, %v216
        %297 = vrot.lane.b32.xlu0 %v293, 122
        %v298 = vpop.permute.xlu0 %297
        %299 = vrot.lane.b32.xlu0 %v294, 122
        %v300 = vpop.permute.xlu0 %299
        %v303 = vadd.f32 %v289, %v298
        %v304 = vadd.f32 %v290, %v300
        %v305 = vld [vmem:[#allocation2 + $0x1] sm:$0xff]
        %v306 = vld [vmem:[#allocation2 + $0x9] sm:$0xff]
        %s307 = sld [smem:[#allocation7 + $0x7]]
        %v308 = vstv %s307
        %v309 = vmul.f32 %v308, %v305
        %v310 = vmul.f32 %v308, %v306
        %s311 = sld [smem:[#allocation7 + $0x8]]
        %v312 = vstv %s311
        %v313 = vmul.f32 %v312, %v305
        %v314 = vmul.f32 %v312, %v306
        %317 = vrot.lane.b32.xlu0 %v313, 127
        %v318 = vpop.permute.xlu0 %317
        %319 = vrot.lane.b32.xlu0 %v314, 127
        %v320 = vpop.permute.xlu0 %319
        %v323 = vadd.f32 %v309, %v318
        %v324 = vadd.f32 %v310, %v320
        %s325 = sld [smem:[#allocation7 + $0x9]]
        %v326 = vstv %s325
        %v327 = vmul.f32 %v326, %v305
        %v328 = vmul.f32 %v326, %v306
        %331 = vrot.lane.b32.xlu0 %v327, 126
        %v332 = vpop.permute.xlu0 %331
        %333 = vrot.lane.b32.xlu0 %v328, 126
        %v334 = vpop.permute.xlu0 %333
        %v337 = vadd.f32 %v323, %v332
        %v338 = vadd.f32 %v324, %v334
        %s339 = sld [smem:[#allocation7 + $0xa]]
        %v340 = vstv %s339
        %v341 = vmul.f32 %v340, %v305
        %v342 = vmul.f32 %v340, %v306
        %345 = vrot.lane.b32.xlu0 %v341, 125
        %v346 = vpop.permute.xlu0 %345
        %347 = vrot.lane.b32.xlu0 %v342, 125
        %v348 = vpop.permute.xlu0 %347
        %v351 = vadd.f32 %v337, %v346
        %v352 = vadd.f32 %v338, %v348
        %s353 = sld [smem:[#allocation7 + $0xb]]
        %v354 = vstv %s353
        %v355 = vmul.f32 %v354, %v305
        %v356 = vmul.f32 %v354, %v306
        %359 = vrot.lane.b32.xlu0 %v355, 124
        %v360 = vpop.permute.xlu0 %359
        %361 = vrot.lane.b32.xlu0 %v356, 124
        %v362 = vpop.permute.xlu0 %361
        %v365 = vadd.f32 %v351, %v360
        %v366 = vadd.f32 %v352, %v362
        %s367 = sld [smem:[#allocation7 + $0xc]]
        %v368 = vstv %s367
        %v369 = vmul.f32 %v368, %v305
        %v370 = vmul.f32 %v368, %v306
        %373 = vrot.lane.b32.xlu0 %v369, 123
        %v374 = vpop.permute.xlu0 %373
        %375 = vrot.lane.b32.xlu0 %v370, 123
        %v376 = vpop.permute.xlu0 %375
        %v379 = vadd.f32 %v365, %v374
        %v380 = vadd.f32 %v366, %v376
        %s381 = sld [smem:[#allocation7 + $0xd]]
        %v382 = vstv %s381
        %v383 = vmul.f32 %v382, %v305
        %v384 = vmul.f32 %v382, %v306
        %387 = vrot.lane.b32.xlu0 %v383, 122
        %v388 = vpop.permute.xlu0 %387
        %389 = vrot.lane.b32.xlu0 %v384, 122
        %v390 = vpop.permute.xlu0 %389
        %v393 = vadd.f32 %v379, %v388
        %v394 = vadd.f32 %v380, %v390
        %v395 = vld [vmem:[#allocation2 + $0x2] sm:$0xff]
        %v396 = vld [vmem:[#allocation2 + $0xa] sm:$0xff]
        %s397 = sld [smem:[#allocation7 + $0xe]]
        %v398 = vstv %s397
        %v399 = vmul.f32 %v398, %v395
        %v400 = vmul.f32 %v398, %v396
        %s401 = sld [smem:[#allocation7 + $0xf]]
        %v402 = vstv %s401
        %v403 = vmul.f32 %v402, %v395
        %v404 = vmul.f32 %v402, %v396
        %407 = vrot.lane.b32.xlu0 %v403, 127
        %v408 = vpop.permute.xlu0 %407
        %409 = vrot.lane.b32.xlu0 %v404, 127
        %v410 = vpop.permute.xlu0 %409
        %v413 = vadd.f32 %v399, %v408
        %v414 = vadd.f32 %v400, %v410
        %s415 = sld [smem:[#allocation7 + $0x10]]
        %v416 = vstv %s415
        %v417 = vmul.f32 %v416, %v395
        %v418 = vmul.f32 %v416, %v396
        %421 = vrot.lane.b32.xlu0 %v417, 126
        %v422 = vpop.permute.xlu0 %421
        %423 = vrot.lane.b32.xlu0 %v418, 126
        %v424 = vpop.permute.xlu0 %423
        %v427 = vadd.f32 %v413, %v422
        %v428 = vadd.f32 %v414, %v424
        %s429 = sld [smem:[#allocation7 + $0x11]]
        %v430 = vstv %s429
        %v431 = vmul.f32 %v430, %v395
        %v432 = vmul.f32 %v430, %v396
        %435 = vrot.lane.b32.xlu0 %v431, 125
        %v436 = vpop.permute.xlu0 %435
        %437 = vrot.lane.b32.xlu0 %v432, 125
        %v438 = vpop.permute.xlu0 %437
        %v441 = vadd.f32 %v427, %v436
        %v442 = vadd.f32 %v428, %v438
        %s443 = sld [smem:[#allocation7 + $0x12]]
        %v444 = vstv %s443
        %v445 = vmul.f32 %v444, %v395
        %v446 = vmul.f32 %v444, %v396
        %449 = vrot.lane.b32.xlu0 %v445, 124
        %v450 = vpop.permute.xlu0 %449
        %451 = vrot.lane.b32.xlu0 %v446, 124
        %v452 = vpop.permute.xlu0 %451
        %v455 = vadd.f32 %v441, %v450
        %v456 = vadd.f32 %v442, %v452
        %s457 = sld [smem:[#allocation7 + $0x13]]
        %v458 = vstv %s457
        %v459 = vmul.f32 %v458, %v395
        %v460 = vmul.f32 %v458, %v396
        %463 = vrot.lane.b32.xlu0 %v459, 123
        %v464 = vpop.permute.xlu0 %463
        %465 = vrot.lane.b32.xlu0 %v460, 123
        %v466 = vpop.permute.xlu0 %465
        %v469 = vadd.f32 %v455, %v464
        %v470 = vadd.f32 %v456, %v466
        %s471 = sld [smem:[#allocation7 + $0x14]]
        %v472 = vstv %s471
        %v473 = vmul.f32 %v472, %v395
        %v474 = vmul.f32 %v472, %v396
        %477 = vrot.lane.b32.xlu0 %v473, 122
        %v478 = vpop.permute.xlu0 %477
        %479 = vrot.lane.b32.xlu0 %v474, 122
        %v480 = vpop.permute.xlu0 %479
        %v483 = vadd.f32 %v469, %v478
        %v484 = vadd.f32 %v470, %v480
        %v485 = vld [vmem:[#allocation2 + $0x3] sm:$0xff]
        %v486 = vld [vmem:[#allocation2 + $0xb] sm:$0xff]
        %s487 = sld [smem:[#allocation7 + $0x15]]
        %v488 = vstv %s487
        %v489 = vmul.f32 %v488, %v485
        %v490 = vmul.f32 %v488, %v486
        %s491 = sld [smem:[#allocation7 + $0x16]]
        %v492 = vstv %s491
        %v493 = vmul.f32 %v492, %v485
        %v494 = vmul.f32 %v492, %v486
        %497 = vrot.lane.b32.xlu0 %v493, 127
        %v498 = vpop.permute.xlu0 %497
        %499 = vrot.lane.b32.xlu0 %v494, 127
        %v500 = vpop.permute.xlu0 %499
        %v503 = vadd.f32 %v489, %v498
        %v504 = vadd.f32 %v490, %v500
        %s505 = sld [smem:[#allocation7 + $0x17]]
        %v506 = vstv %s505
        %v507 = vmul.f32 %v506, %v485
        %v508 = vmul.f32 %v506, %v486
        %511 = vrot.lane.b32.xlu0 %v507, 126
        %v512 = vpop.permute.xlu0 %511
        %513 = vrot.lane.b32.xlu0 %v508, 126
        %v514 = vpop.permute.xlu0 %513
        %v517 = vadd.f32 %v503, %v512
        %v518 = vadd.f32 %v504, %v514
        %s519 = sld [smem:[#allocation7 + $0x18]]
        %v520 = vstv %s519
        %v521 = vmul.f32 %v520, %v485
        %v522 = vmul.f32 %v520, %v486
        %525 = vrot.lane.b32.xlu0 %v521, 125
        %v526 = vpop.permute.xlu0 %525
        %527 = vrot.lane.b32.xlu0 %v522, 125
        %v528 = vpop.permute.xlu0 %527
        %v531 = vadd.f32 %v517, %v526
        %v532 = vadd.f32 %v518, %v528
        %s533 = sld [smem:[#allocation7 + $0x19]]
        %v534 = vstv %s533
        %v535 = vmul.f32 %v534, %v485
        %v536 = vmul.f32 %v534, %v486
        %539 = vrot.lane.b32.xlu0 %v535, 124
        %v540 = vpop.permute.xlu0 %539
        %541 = vrot.lane.b32.xlu0 %v536, 124
        %v542 = vpop.permute.xlu0 %541
        %v545 = vadd.f32 %v531, %v540
        %v546 = vadd.f32 %v532, %v542
        %s547 = sld [smem:[#allocation7 + $0x1a]]
        %v548 = vstv %s547
        %v549 = vmul.f32 %v548, %v485
        %v550 = vmul.f32 %v548, %v486
        %553 = vrot.lane.b32.xlu0 %v549, 123
        %v554 = vpop.permute.xlu0 %553
        %555 = vrot.lane.b32.xlu0 %v550, 123
        %v556 = vpop.permute.xlu0 %555
        %v559 = vadd.f32 %v545, %v554
        %v560 = vadd.f32 %v546, %v556
        %s561 = sld [smem:[#allocation7 + $0x1b]]
        %v562 = vstv %s561
        %v563 = vmul.f32 %v562, %v485
        %v564 = vmul.f32 %v562, %v486
        %567 = vrot.lane.b32.xlu0 %v563, 122
        %v568 = vpop.permute.xlu0 %567
        %569 = vrot.lane.b32.xlu0 %v564, 122
        %v570 = vpop.permute.xlu0 %569
        %v573 = vadd.f32 %v559, %v568
        %v574 = vadd.f32 %v560, %v570
        %v575 = vld [vmem:[#allocation2 + $0x4] sm:$0xff]
        %v576 = vld [vmem:[#allocation2 + $0xc] sm:$0xff]
        %s577 = sld [smem:[#allocation7 + $0x1c]]
        %v578 = vstv %s577
        %v579 = vmul.f32 %v578, %v575
        %v580 = vmul.f32 %v578, %v576
        %s581 = sld [smem:[#allocation7 + $0x1d]]
        %v582 = vstv %s581
        %v583 = vmul.f32 %v582, %v575
        %v584 = vmul.f32 %v582, %v576
        %587 = vrot.lane.b32.xlu0 %v583, 127
        %v588 = vpop.permute.xlu0 %587
        %589 = vrot.lane.b32.xlu0 %v584, 127
        %v590 = vpop.permute.xlu0 %589
        %v593 = vadd.f32 %v579, %v588
        %v594 = vadd.f32 %v580, %v590
        %s595 = sld [smem:[#allocation7 + $0x1e]]
        %v596 = vstv %s595
        %v597 = vmul.f32 %v596, %v575
        %v598 = vmul.f32 %v596, %v576
        %601 = vrot.lane.b32.xlu0 %v597, 126
        %v602 = vpop.permute.xlu0 %601
        %603 = vrot.lane.b32.xlu0 %v598, 126
        %v604 = vpop.permute.xlu0 %603
        %v607 = vadd.f32 %v593, %v602
        %v608 = vadd.f32 %v594, %v604
        %s609 = sld [smem:[#allocation7 + $0x1f]]
        %v610 = vstv %s609
        %v611 = vmul.f32 %v610, %v575
        %v612 = vmul.f32 %v610, %v576
        %615 = vrot.lane.b32.xlu0 %v611, 125
        %v616 = vpop.permute.xlu0 %615
        %617 = vrot.lane.b32.xlu0 %v612, 125
        %v618 = vpop.permute.xlu0 %617
        %v621 = vadd.f32 %v607, %v616
        %v622 = vadd.f32 %v608, %v618
        %s623 = sld [smem:[#allocation7 + $0x20]]
        %v624 = vstv %s623
        %v625 = vmul.f32 %v624, %v575
        %v626 = vmul.f32 %v624, %v576
        %629 = vrot.lane.b32.xlu0 %v625, 124
        %v630 = vpop.permute.xlu0 %629
        %631 = vrot.lane.b32.xlu0 %v626, 124
        %v632 = vpop.permute.xlu0 %631
        %v635 = vadd.f32 %v621, %v630
        %v636 = vadd.f32 %v622, %v632
        %s637 = sld [smem:[#allocation7 + $0x21]]
        %v638 = vstv %s637
        %v639 = vmul.f32 %v638, %v575
        %v640 = vmul.f32 %v638, %v576
        %643 = vrot.lane.b32.xlu0 %v639, 123
        %v644 = vpop.permute.xlu0 %643
        %645 = vrot.lane.b32.xlu0 %v640, 123
        %v646 = vpop.permute.xlu0 %645
        %v649 = vadd.f32 %v635, %v644
        %v650 = vadd.f32 %v636, %v646
        %s651 = sld [smem:[#allocation7 + $0x22]]
        %v652 = vstv %s651
        %v653 = vmul.f32 %v652, %v575
        %v654 = vmul.f32 %v652, %v576
        %657 = vrot.lane.b32.xlu0 %v653, 122
        %v658 = vpop.permute.xlu0 %657
        %659 = vrot.lane.b32.xlu0 %v654, 122
        %v660 = vpop.permute.xlu0 %659
        %v663 = vadd.f32 %v649, %v658
        %v664 = vadd.f32 %v650, %v660
        %v665 = vld [vmem:[#allocation2 + $0x5] sm:$0xff]
        %v666 = vld [vmem:[#allocation2 + $0xd] sm:$0xff]
        %s667 = sld [smem:[#allocation7 + $0x23]]
        %v668 = vstv %s667
        %v669 = vmul.f32 %v668, %v665
        %v670 = vmul.f32 %v668, %v666
        %s671 = sld [smem:[#allocation7 + $0x24]]
        %v672 = vstv %s671
        %v673 = vmul.f32 %v672, %v665
        %v674 = vmul.f32 %v672, %v666
        %677 = vrot.lane.b32.xlu0 %v673, 127
        %v678 = vpop.permute.xlu0 %677
        %679 = vrot.lane.b32.xlu0 %v674, 127
        %v680 = vpop.permute.xlu0 %679
        %v683 = vadd.f32 %v669, %v678
        %v684 = vadd.f32 %v670, %v680
        %s685 = sld [smem:[#allocation7 + $0x25]]
        %v686 = vstv %s685
        %v687 = vmul.f32 %v686, %v665
        %v688 = vmul.f32 %v686, %v666
        %691 = vrot.lane.b32.xlu0 %v687, 126
        %v692 = vpop.permute.xlu0 %691
        %693 = vrot.lane.b32.xlu0 %v688, 126
        %v694 = vpop.permute.xlu0 %693
        %v697 = vadd.f32 %v683, %v692
        %v698 = vadd.f32 %v684, %v694
        %s699 = sld [smem:[#allocation7 + $0x26]]
        %v700 = vstv %s699
        %v701 = vmul.f32 %v700, %v665
        %v702 = vmul.f32 %v700, %v666
        %705 = vrot.lane.b32.xlu0 %v701, 125
        %v706 = vpop.permute.xlu0 %705
        %707 = vrot.lane.b32.xlu0 %v702, 125
        %v708 = vpop.permute.xlu0 %707
        %v711 = vadd.f32 %v697, %v706
        %v712 = vadd.f32 %v698, %v708
        %s713 = sld [smem:[#allocation7 + $0x27]]
        %v714 = vstv %s713
        %v715 = vmul.f32 %v714, %v665
        %v716 = vmul.f32 %v714, %v666
        %719 = vrot.lane.b32.xlu0 %v715, 124
        %v720 = vpop.permute.xlu0 %719
        %721 = vrot.lane.b32.xlu0 %v716, 124
        %v722 = vpop.permute.xlu0 %721
        %v725 = vadd.f32 %v711, %v720
        %v726 = vadd.f32 %v712, %v722
        %s727 = sld [smem:[#allocation7 + $0x28]]
        %v728 = vstv %s727
        %v729 = vmul.f32 %v728, %v665
        %v730 = vmul.f32 %v728, %v666
        %733 = vrot.lane.b32.xlu0 %v729, 123
        %v734 = vpop.permute.xlu0 %733
        %735 = vrot.lane.b32.xlu0 %v730, 123
        %v736 = vpop.permute.xlu0 %735
        %v739 = vadd.f32 %v725, %v734
        %v740 = vadd.f32 %v726, %v736
        %s741 = sld [smem:[#allocation7 + $0x29]]
        %v742 = vstv %s741
        %v743 = vmul.f32 %v742, %v665
        %v744 = vmul.f32 %v742, %v666
        %747 = vrot.lane.b32.xlu0 %v743, 122
        %v748 = vpop.permute.xlu0 %747
        %749 = vrot.lane.b32.xlu0 %v744, 122
        %v750 = vpop.permute.xlu0 %749
        %v753 = vadd.f32 %v739, %v748
        %v754 = vadd.f32 %v740, %v750
        %v755 = vld [vmem:[#allocation2 + $0x6] sm:$0xff]
        %v756 = vld [vmem:[#allocation2 + $0xe] sm:$0xff]
        %s757 = sld [smem:[#allocation7 + $0x2a]]
        %v758 = vstv %s757
        %v759 = vmul.f32 %v758, %v755
        %v760 = vmul.f32 %v758, %v756
        %s761 = sld [smem:[#allocation7 + $0x2b]]
        %v762 = vstv %s761
        %v763 = vmul.f32 %v762, %v755
        %v764 = vmul.f32 %v762, %v756
        %767 = vrot.lane.b32.xlu0 %v763, 127
        %v768 = vpop.permute.xlu0 %767
        %769 = vrot.lane.b32.xlu0 %v764, 127
        %v770 = vpop.permute.xlu0 %769
        %v773 = vadd.f32 %v759, %v768
        %v774 = vadd.f32 %v760, %v770
        %s775 = sld [smem:[#allocation7 + $0x2c]]
        %v776 = vstv %s775
        %v777 = vmul.f32 %v776, %v755
        %v778 = vmul.f32 %v776, %v756
        %781 = vrot.lane.b32.xlu0 %v777, 126
        %v782 = vpop.permute.xlu0 %781
        %783 = vrot.lane.b32.xlu0 %v778, 126
        %v784 = vpop.permute.xlu0 %783
        %v787 = vadd.f32 %v773, %v782
        %v788 = vadd.f32 %v774, %v784
        %s789 = sld [smem:[#allocation7 + $0x2d]]
        %v790 = vstv %s789
        %v791 = vmul.f32 %v790, %v755
        %v792 = vmul.f32 %v790, %v756
        %795 = vrot.lane.b32.xlu0 %v791, 125
        %v796 = vpop.permute.xlu0 %795
        %797 = vrot.lane.b32.xlu0 %v792, 125
        %v798 = vpop.permute.xlu0 %797
        %v801 = vadd.f32 %v787, %v796
        %v802 = vadd.f32 %v788, %v798
        %s803 = sld [smem:[#allocation7 + $0x2e]]
        %v804 = vstv %s803
        %v805 = vmul.f32 %v804, %v755
        %v806 = vmul.f32 %v804, %v756
        %809 = vrot.lane.b32.xlu0 %v805, 124
        %v810 = vpop.permute.xlu0 %809
        %811 = vrot.lane.b32.xlu0 %v806, 124
        %v812 = vpop.permute.xlu0 %811
        %v815 = vadd.f32 %v801, %v810
        %v816 = vadd.f32 %v802, %v812
        %s817 = sld [smem:[#allocation7 + $0x2f]]
        %v818 = vstv %s817
        %v819 = vmul.f32 %v818, %v755
        %v820 = vmul.f32 %v818, %v756
        %823 = vrot.lane.b32.xlu0 %v819, 123
        %v824 = vpop.permute.xlu0 %823
        %825 = vrot.lane.b32.xlu0 %v820, 123
        %v826 = vpop.permute.xlu0 %825
        %v829 = vadd.f32 %v815, %v824
        %v830 = vadd.f32 %v816, %v826
        %s831 = sld [smem:[#allocation7 + $0x30]]
        %v832 = vstv %s831
        %v833 = vmul.f32 %v832, %v755
        %v834 = vmul.f32 %v832, %v756
        %837 = vrot.lane.b32.xlu0 %v833, 122
        %v838 = vpop.permute.xlu0 %837
        %839 = vrot.lane.b32.xlu0 %v834, 122
        %v840 = vpop.permute.xlu0 %839
        %v843 = vadd.f32 %v829, %v838
        %v844 = vadd.f32 %v830, %v840
        %v845 = vadd.f32 %v303, %v393
        %v846 = vadd.f32 %v304, %v394
        %v847 = vadd.f32 %v483, %v573
        %v848 = vadd.f32 %v484, %v574
        %v849 = vadd.f32 %v663, %v753
        %v850 = vadd.f32 %v664, %v754
        %v851 = vadd.f32 %v845, %v847
        %v852 = vadd.f32 %v846, %v848
        %v853 = vadd.f32 %v849, %v843
        %v854 = vadd.f32 %v850, %v844
        %v855 = vadd.f32 %v851, %v853
        %v856 = vadd.f32 %v852, %v854
        %v857 = vxor.u32 %v855, 2147483648
        %v858 = vxor.u32 %v856, 2147483648
        %v859 = vmul.f32 %v857, 1.442695
        %v860 = vpow.pop %v859
        %v861 = vmul.f32 %v858, 1.442695
        %v862 = vpow.pop %v861
        %v863 = vadd.f32 %v860, 1.0
        %v864 = vadd.f32 %v862, 1.0
        %v865 = vrcp.pop %v863
        %v866 = vmul.f32 %v863, %v865
        %v867 = vsub.f32 1.0, %v866
        %v868 = vmul.f32 %v865, %v867
        %v869 = vadd.f32 %v865, %v868
        %vm870 = vweird.f32 %v863
        %vm871 = vweird.f32 %v865
        %vm872 = vmor %vm870, %vm871
        %v873 = vsel %vm872, %v865, %v869
        %v874 = vand.u32 2147483647, %v863
        %vm875 = vcmp.eq.f32.partialorder %v874, 8.507059e+37
        %v876 = vand.u32 %v863, 2147483648
        %v877 = vor.u32 1.1754944e-38, %v876
        %v878 = vsel %vm875, %v877, %v873
        %v879 = vmul.f32 1.0, %v878
        %v880 = vrcp.pop %v864
        %v881 = vmul.f32 %v864, %v880
        %v882 = vsub.f32 1.0, %v881
        %v883 = vmul.f32 %v880, %v882
        %v884 = vadd.f32 %v880, %v883
        %vm885 = vweird.f32 %v864
        %vm886 = vweird.f32 %v880
        %vm887 = vmor %vm885, %vm886
        %v888 = vsel %vm887, %v880, %v884
        %v889 = vand.u32 2147483647, %v864
        %vm890 = vcmp.eq.f32.partialorder %v889, 8.507059e+37
        %v891 = vand.u32 %v864, 2147483648
        %v892 = vor.u32 1.1754944e-38, %v891
        %v893 = vsel %vm890, %v892, %v888
        %v894 = vmul.f32 1.0, %v893
        %v895 = vrot.slane %v879, 4
        %vm896 = vcmask 1047556
        %v897 = vsel %vm896, 0.0, %v895
        %v899 = vunpack.c.l.s4 1983009808
        %v900 = vunpack.c.0.s8 %v899
        %v901 = vperm.slane %v879, %v900
        %v903 = vunpack.c.l.s4 1983009808
        %v904 = vunpack.c.0.s8 %v903
        %v905 = vperm.slane %v897, %v904
        %v906 = vrot.slane %v901, 4
        %v907 = vsel %vm896, 0.0, %v906
        %v909 = vunpack.c.l.s4 1934713408
        %v910 = vunpack.c.0.s8 %v909
        %v911 = vperm.slane %v901, %v910
        %v913 = vunpack.c.l.s4 1934713408
        %v914 = vunpack.c.0.s8 %v913
        %v915 = vperm.slane %v907, %v914
        %v916 = vrot.slane %v905, 4
        %v917 = vsel %vm896, 0.0, %v916
        %v919 = vunpack.c.l.s4 1934713408
        %v920 = vunpack.c.0.s8 %v919
        %v921 = vperm.slane %v905, %v920
        %v923 = vunpack.c.l.s4 1934713408
        %v924 = vunpack.c.0.s8 %v923
        %v925 = vperm.slane %v917, %v924
        %v926 = vrot.slane %v911, 4
        %v927 = vsel %vm896, 0.0, %v926
        %v928 = vrot.slane %v915, 4
        %v929 = vsel %vm896, 0.0, %v928
        %v930 = vrot.slane %v921, 4
        %v931 = vsel %vm896, 0.0, %v930
        %v932 = vrot.slane %v925, 4
        %v933 = vsel %vm896, 0.0, %v932
        %v934 = vrot.slane %v894, 4
        %v935 = vsel %vm896, 0.0, %v934
        %v937 = vunpack.c.l.s4 1983009808
        %v938 = vunpack.c.0.s8 %v937
        %v939 = vperm.slane %v894, %v938
        %v941 = vunpack.c.l.s4 1983009808
        %v942 = vunpack.c.0.s8 %v941
        %v943 = vperm.slane %v935, %v942
        %v944 = vrot.slane %v939, 4
        %v945 = vsel %vm896, 0.0, %v944
        %v947 = vunpack.c.l.s4 1934713408
        %v948 = vunpack.c.0.s8 %v947
        %v949 = vperm.slane %v939, %v948
        %v951 = vunpack.c.l.s4 1934713408
        %v952 = vunpack.c.0.s8 %v951
        %v953 = vperm.slane %v945, %v952
        %v954 = vrot.slane %v943, 4
        %v955 = vsel %vm896, 0.0, %v954
        %v957 = vunpack.c.l.s4 1934713408
        %v958 = vunpack.c.0.s8 %v957
        %v959 = vperm.slane %v943, %v958
        %v961 = vunpack.c.l.s4 1934713408
        %v962 = vunpack.c.0.s8 %v961
        %v963 = vperm.slane %v955, %v962
        %v964 = vrot.slane %v949, 4
        %v965 = vsel %vm896, 0.0, %v964
        %v966 = vrot.slane %v953, 4
        %v967 = vsel %vm896, 0.0, %v966
        %v968 = vrot.slane %v959, 4
        %v969 = vsel %vm896, 0.0, %v968
        %v970 = vrot.slane %v963, 4
        %v971 = vsel %vm896, 0.0, %v970
        %973 = vrot.lane.b32.xlu0 %v927, 16
        %v974 = vpop.permute.xlu0 %973
        %977 = vrot.lane.b32.xlu0 %v915, 32
        %v978 = vpop.permute.xlu0 %977
        %981 = vrot.lane.b32.xlu0 %v929, 48
        %v982 = vpop.permute.xlu0 %981
        %985 = vrot.lane.b32.xlu0 %v921, 64
        %v986 = vpop.permute.xlu0 %985
        %989 = vrot.lane.b32.xlu0 %v931, 80
        %v990 = vpop.permute.xlu0 %989
        %993 = vrot.lane.b32.xlu0 %v925, 96
        %v994 = vpop.permute.xlu0 %993
        %997 = vrot.lane.b32.xlu0 %v933, 112
        %v998 = vpop.permute.xlu0 %997
        %1001 = vrot.lane.b32.xlu0 %v965, 16
        %v1002 = vpop.permute.xlu0 %1001
        %1005 = vrot.lane.b32.xlu0 %v953, 32
        %v1006 = vpop.permute.xlu0 %1005
        %1009 = vrot.lane.b32.xlu0 %v967, 48
        %v1010 = vpop.permute.xlu0 %1009
        %1013 = vrot.lane.b32.xlu0 %v959, 64
        %v1014 = vpop.permute.xlu0 %1013
        %1017 = vrot.lane.b32.xlu0 %v969, 80
        %v1018 = vpop.permute.xlu0 %1017
        %1021 = vrot.lane.b32.xlu0 %v963, 96
        %v1022 = vpop.permute.xlu0 %1021
        %1025 = vrot.lane.b32.xlu0 %v971, 112
        %v1026 = vpop.permute.xlu0 %1025
        %vm1028 = vcmask 130048
        %v1029 = vsel %vm1028, %v911, %v974
        %vm1030 = vcmask 261120
        %v1031 = vsel %vm1030, %v1029, %v978
        %vm1032 = vcmask 392192
        %v1033 = vsel %vm1032, %v1031, %v982
        %vm1034 = vcmask 523264
        %v1035 = vsel %vm1034, %v1033, %v986
        %vm1036 = vcmask 654336
        %v1037 = vsel %vm1036, %v1035, %v990
        %vm1038 = vcmask 785408
        %v1039 = vsel %vm1038, %v1037, %v994
        %vm1040 = vcmask 916480
        %v1041 = vsel %vm1040, %v1039, %v998
        %v1042 = vsel %vm1028, %v949, %v1002
        %v1043 = vsel %vm1030, %v1042, %v1006
        %v1044 = vsel %vm1032, %v1043, %v1010
        %v1045 = vsel %vm1034, %v1044, %v1014
        %v1046 = vsel %vm1036, %v1045, %v1018
        %v1047 = vsel %vm1038, %v1046, %v1022
        %v1048 = vsel %vm1040, %v1047, %v1026
        %v1051 = vrot.slane %v1048, 7
        %vm1052 = vcmask 1040384
        %v1053 = vsel %vm1052, %v1041, %v1051
        %v1055 = vlaneseq
        %vm1056 = vcmp.ge.s32.totalorder %v1055, 0
        %vm1057 = vcmp.lt.s32.totalorder %v1055, 256
        %vm1058 = vmand %vm1056, %vm1057
        %1059 = vst.msk [vmem:[%s177] sm:$0x3] %vm1058, %v1053
        %s1060 = sand.u32 %s75, 1
        %s1061 = scalar_lea.sflag [#allocation5], %s1060
        %s1062 = sand.u32 %s75, 1
        %s1063 = smul.addr %s1062, 2
        %s1064 = scalar_lea.vmem [#allocation8], %s1063
        // Predicated region
        $region37: #{tpu_custom_call.1} parent=27 // pred_check
          %p1065 = pneg %p85
        $region38: #{tpu_custom_call.1} parent=27 // pred_check_branch
          %1067 = sbr.rel (%p1065) target = $region40
        $region39: #{tpu_custom_call.1} parent=27 // pred_region
          %1069 = vsyncadd %s1061, 0
          %s1070 = smul.addr %s20, 2
          %s1071 = scalar_lea.hbm %s2, %s1070
          %s1073 = sshll.u32 %s1064, 4
          %s1074 = int_to_ptr.vmem [resolvable:$true] %s1073
          %s1075 = sshll.u32 %s1071, 4
          %s1076 = int_to_ptr.hbm [resolvable:$true] %s1075
          %1078 = dma.vmem_to_hbm [thread:$0]  %s1074, 32, %s1076, %s1061
        $region40: #{tpu_custom_call.1} parent=27 // pred_fallthru
          _
      $region28: #{tpu_custom_call.1} parent=5 // pred_fallthru
        _
      %p1079 = scmp.le.s32.totalorder 2, %s15
      // Predicated region
      $region41: #{tpu_custom_call.1} parent=5 // pred_check
        %p1080 = pneg %p1079
      $region42: #{tpu_custom_call.1} parent=5 // pred_check_branch
        %1082 = sbr.rel (%p1080) target = $region44
      $region43: #{tpu_custom_call.1} parent=5 // pred_region
        %s1083 = ssub.s32 %s15, 2
        // Predicated region
        $region45: #{tpu_custom_call.1} parent=43 // pred_check
          %p1084 = pneg %p91
        $region46: #{tpu_custom_call.1} parent=43 // pred_check_branch
          %1086 = sbr.rel (%p1084) target = $region48
        $region47: #{tpu_custom_call.1} parent=43 // pred_region
          %s1087 = sand.u32 %s76, 1
          %s1088 = scalar_lea.sflag [#allocation5], %s1087
          %s1089 = sand.u32 %s76, 1
          %s1090 = smul.addr %s1089, 2
          %s1091 = scalar_lea.vmem [#allocation8], %s1090
          %1093 = dma.done %s1088, 32
        $region48: #{tpu_custom_call.1} parent=43 // pred_fallthru
          _
      $region44: #{tpu_custom_call.1} parent=5 // pred_fallthru
        _
    $region6: #{tpu_custom_call.1} parent=1 // loop_footer
      %s19 = sadd.s32 1, %s15
    $region7: #{tpu_custom_call.1} parent=1 // loop_footer_branch
      %14 = sbr.rel target = $region3
    $region8: #{tpu_custom_call.1} parent=1 // loop_exit
      _
    %1094 = vsyncpa [#allocation4], 1
    %s1095 = scalar_lea.sflag [#allocation4], 1
    %1096 = vsyncpa %s1095, 1
    %1097 = vsyncpa [#allocation5], 1
    %s1098 = scalar_lea.sflag [#allocation5], 1
    %1099 = vsyncpa %s1098, 1
    %1100 = vsyncpa [#allocation6], 1
    %s1101 = scalar_lea.sflag [#allocation6], 1
    %1102 = vsyncpa %s1101, 1

</llo_original>
